<compile_context>
chip_gen: v6e
topology: v6e:2x2x1
jax: 0.10.0
libtpu: 0.0.40
codegen_flags: <defaults>
</compile_context>

<pallas_src>
import jax
import jax.numpy as jnp
from jax.experimental import pallas as pl
from jax.experimental.pallas import tpu as pltpu


def _is_pow2(v):
    return v > 0 and (v & (v - 1)) == 0


def _tensorcores_per_chip():
    """Dual-TC / megacore chips want >= 2 parallel grid steps; single-TC chips
    (v5e, v6e) want the grid collapsed to minimize per-step overhead."""
    try:
        kind = jax.devices()[0].device_kind.lower()
    except Exception:
        return 1
    if ("v7" in kind) or ("v4" in kind) or ("v5p" in kind):
        return 2
    return 1


def _choose_pack(n, cin, n_tc):
    """Pack `pack` batch elements onto sublanes (pack*Cin channels) so the 8
    f32 sublanes fill, but never drop the grid below n_tc steps."""
    target = max(1, 8 // max(cin, 1))
    pack = 1
    for p in range(1, target + 1):
        if n % p == 0 and (n // p) >= n_tc:
            pack = p
    return pack


def _make_dsc_kernel(H, W, Cin, Cout, pack):
    HW = H * W
    C_p = pack * Cin

    def kernel(x_ref, w_ref, o_ref):
        # x_ref : (1, pack*Cin, HW)   pack batch elements stacked on sublanes
        # w_ref : (R, 9+Cin+1) packed weight slab:
        #           [:C_p , 0:9]        depthwise taps per packed channel
        #           [:Cout, 9:9+Cin]    pointwise weight (Cout, Cin)
        #           [:Cout, 9+Cin]      folded bias (Wp @ bd + bp)
        # o_ref : (1, pack*Cout, HW)
        x = x_ref[0].astype(jnp.float32)                          # (C_p, HW)

        lane = jax.lax.broadcasted_iota(jnp.int32, (1, HW), 1)
        if _is_pow2(W):
            col = lane & (W - 1)                                  # single VPU and
            row = lane >> (W.bit_length() - 1)                    # single VPU shift
        else:
            row = lane // W
            col = lane - row * W

        # Column (dw) masks applied to the SOURCE before rolling: the lanes that
        # wrap across a row boundary are exactly the zero-padded columns, so one
        # pre-masked copy serves all 3 dh taps of that dw.
        x_by_dw = (
            jnp.where(col <= W - 2, x, 0.0),   # dw = 0  (window reads col c-1)
            x,                                 # dw = 1
            jnp.where(col >= 1, x, 0.0),       # dw = 2  (window reads col c+1)
        )
        row_keep = (row >= 1, None, row <= H - 2)                 # dh = 0, 1, 2

        # ---- depthwise 3x3: 8 XLU rolls + per-tap VPU masked MAC ----
        acc = jnp.zeros((C_p, HW), jnp.float32)
        for dh in range(3):
            for dw in range(3):
                shift = (dh - 1) * W + (dw - 1)                   # source offset
                src = x_by_dw[dw]
                if shift == 0:
                    shifted = src
                else:
                    # shifted[p] = src[p + shift]
                    shifted = pltpu.roll(src, shift=(-shift) % HW, axis=1)
                if row_keep[dh] is not None:
                    shifted = jnp.where(row_keep[dh], shifted, 0.0)
                tap = dh * 3 + dw
                acc = acc + shifted * w_ref[0:C_p, tap:tap + 1]   # (C_p,HW)*(C_p,1)

        # ---- pointwise 1x1: per-batch-group VPU broadcast-MACs ----
        # TODO(synk): switch to an MXU matmul (HW_tile,Cin)@(Cin,Cout) if channel
        # counts ever reach ~64-256; at Cin=4/Cout=8 the MXU would be <1% utilised.
        wp_cols = [w_ref[0:Cout, 9 + ci:10 + ci] for ci in range(Cin)]   # (Cout,1)
        bias_col = w_ref[0:Cout, 9 + Cin:10 + Cin]                       # (Cout,1)
        outs = []
        for g in range(pack):                       # block-diagonal over batch groups
            og = jnp.zeros((Cout, HW), jnp.float32)
            for ci in range(Cin):
                og = og + wp_cols[ci] * acc[g * Cin + ci:g * Cin + ci + 1, :]
            outs.append(og + bias_col)
        out = outs[0] if pack == 1 else jnp.concatenate(outs, axis=0)

        o_ref[0] = out.astype(o_ref.dtype)                        # lane-dense store

    return kernel


def depthwise_separable_conv(x_nchw, wd, bd, wp, bp):
    """
    x_nchw: (N, Cin, H, W)    float32
    wd    : (Cin, 1, 3, 3)    depthwise weight (PyTorch layout)
    bd    : (Cin,)            depthwise bias
    wp    : (Cout, Cin, 1, 1) pointwise weight (PyTorch layout)
    bp    : (Cout,)           pointwise bias
    returns (N, Cout, H, W)
    """
    N, Cin, H, W = x_nchw.shape
    Cout = wp.shape[0]
    HW = H * W

    n_tc = _tensorcores_per_chip()
    pack = _choose_pack(N, Cin, n_tc)
    G = N // pack
    C_p = pack * Cin
    C_po = pack * Cout

    # pure reshape (free) -- packs `pack` consecutive batch elements on sublanes
    x_k = x_nchw.reshape(G, C_p, HW)

    # ---- one packed f32 weight slab -> a single tiny weight DMA ----
    ncol = 9 + Cin + 1
    R = max(C_p, Cout)
    wd_flat = wd[:, 0, :, :].reshape(Cin, 9).astype(jnp.float32)   # (Cin, 9)
    wd_packed = jnp.tile(wd_flat, (pack, 1))                       # (C_p, 9)
    wp_mat = wp[:, :, 0, 0].astype(jnp.float32)                    # (Cout, Cin)
    bp_eff = wp_mat @ bd.astype(jnp.float32) + bp.astype(jnp.float32)
    slab = jnp.zeros((R, ncol), jnp.float32)
    slab = slab.at[0:C_p, 0:9].set(wd_packed)
    slab = slab.at[0:Cout, 9:9 + Cin].set(wp_mat)
    slab = slab.at[0:Cout, 9 + Cin].set(bp_eff)

    kernel = _make_dsc_kernel(H, W, Cin, Cout, pack)

    flops = 2 * N * HW * Cin * 9 + 2 * N * HW * Cin * Cout
    bytes_accessed = 4 * (N * Cin * HW + N * Cout * HW + slab.size)

    out_flat = pl.pallas_call(
        kernel,
        out_shape=jax.ShapeDtypeStruct((G, C_po, HW), x_nchw.dtype),
        grid_spec=pltpu.PrefetchScalarGridSpec(
            num_scalar_prefetch=0,
            grid=(G,),
            in_specs=[
                pl.BlockSpec((1, C_p, HW), lambda n: (n, 0, 0)),
                pl.BlockSpec((R, ncol), lambda n: (0, 0)),
            ],
            out_specs=pl.BlockSpec((1, C_po, HW), lambda n: (n, 0, 0)),
        ),
        compiler_params=pltpu.CompilerParams(
            dimension_semantics=("parallel",)),
        cost_estimate=pl.CostEstimate(
            flops=flops, transcendentals=0, bytes_accessed=bytes_accessed),
    )(x_k, slab)

    return out_flat.reshape(N, Cout, H, W)


def _reference(x_nchw, wd, bd, wp, bp):
    """Pure-JAX reference matching PyTorch Conv2d semantics."""
    Cin = x_nchw.shape[1]
    dn = jax.lax.conv_dimension_numbers(x_nchw.shape, wd.shape,
                                        ("NCHW", "OIHW", "NCHW"))
    dw_out = jax.lax.conv_general_dilated(
        x_nchw, wd, window_strides=(1, 1), padding=((1, 1), (1, 1)),
        dimension_numbers=dn, feature_group_count=Cin)
    dw_out = dw_out + bd.reshape(1, -1, 1, 1)
    dn2 = jax.lax.conv_dimension_numbers(dw_out.shape, wp.shape,
                                         ("NCHW", "OIHW", "NCHW"))
    pw_out = jax.lax.conv_general_dilated(
        dw_out, wp, window_strides=(1, 1), padding=((0, 0), (0, 0)),
        dimension_numbers=dn2)
    return pw_out + bp.reshape(1, -1, 1, 1)


if __name__ == "__main__":
    N, Cin, Cout, H, W = 2, 4, 8, 16, 16

    key = jax.random.PRNGKey(0)
    k1, k2, k3, k4, k5 = jax.random.split(key, 5)

    x = jax.random.normal(k1, (N, Cin, H, W), dtype=jnp.float32)
    wd = jax.random.normal(k2, (Cin, 1, 3, 3), dtype=jnp.float32) * 0.1
    bd = jax.random.normal(k3, (Cin,), dtype=jnp.float32) * 0.1
    wp = jax.random.normal(k4, (Cout, Cin, 1, 1), dtype=jnp.float32) * 0.1
    bp = jax.random.normal(k5, (Cout,), dtype=jnp.float32) * 0.1

    out = depthwise_separable_conv(x, wd, bd, wp, bp)
    out = jax.block_until_ready(out)

    ref = _reference(x, wd, bd, wp, bp)
    assert out.shape == (N, Cout, H, W)
    assert jnp.allclose(out, ref, atol=1e-4, rtol=1e-4)

    print("KERNEL_OK")
</pallas_src>

<mosaic_0001>
module attributes {stable_mosaic.version = 11 : i64} {
  func.func @kernel(%arg0: i32, %arg1: memref<1x8x256xf32, #tpu.memory_space<vmem>>, %arg2: memref<8x14xf32, #tpu.memory_space<vmem>>, %arg3: memref<1x16x256xf32, #tpu.memory_space<vmem>>) attributes {dimension_semantics = [#tpu.dimension_semantics<parallel>], iteration_bounds = array<i64: 1>, scalar_prefetch = 0 : i64, scratch_operands = 0 : i64, tpu.core_type = #tpu.core_type<tc>, window_params = [{transform_indices = @transform_0, window_bounds = array<i64: 1, 8, 256>}, {pipeline_mode = #tpu.pipeline_mode<synchronous>, transform_indices = @transform_1, window_bounds = array<i64: 8, 14>}, {transform_indices = @transform_2, window_bounds = array<i64: 1, 16, 256>}]} {
    %c0 = arith.constant 0 : index
    %c0_0 = arith.constant 0 : index
    %c0_1 = arith.constant 0 : index
    %0 = vector.load %arg1[%c0, %c0_0, %c0_1] : memref<1x8x256xf32, #tpu.memory_space<vmem>>, vector<1x8x256xf32>
    %1 = vector.shape_cast %0 : vector<1x8x256xf32> to vector<8x256xf32>
    %2 = tpu.iota {dimensions = array<i32: 1>} : vector<1x256xi32>
    %c15_i32 = arith.constant 15 : i32
    %3 = vector.broadcast %c15_i32 : i32 to vector<1x256xi32>
    %4 = arith.andi %2, %3 : vector<1x256xi32>
    %c4_i32 = arith.constant 4 : i32
    %5 = vector.broadcast %c4_i32 : i32 to vector<1x256xi32>
    %6 = arith.shrsi %2, %5 : vector<1x256xi32>
    %c14_i32 = arith.constant 14 : i32
    %7 = vector.broadcast %c14_i32 : i32 to vector<1x256xi32>
    %8 = arith.cmpi sle, %4, %7 : vector<1x256xi32>
    %cst = arith.constant 0.000000e+00 : f32
    %9 = vector.shape_cast %8 : vector<1x256xi1> to vector<1x256xi1>
    %10 = vector.broadcast %9 : vector<1x256xi1> to vector<8x256xi1>
    %11 = vector.broadcast %cst : f32 to vector<8x256xf32>
    %12 = arith.select %10, %1, %11 : vector<8x256xi1>, vector<8x256xf32>
    %c1_i32 = arith.constant 1 : i32
    %13 = vector.broadcast %c1_i32 : i32 to vector<1x256xi32>
    %14 = arith.cmpi sge, %4, %13 : vector<1x256xi32>
    %cst_2 = arith.constant 0.000000e+00 : f32
    %15 = vector.shape_cast %14 : vector<1x256xi1> to vector<1x256xi1>
    %16 = vector.broadcast %15 : vector<1x256xi1> to vector<8x256xi1>
    %17 = vector.broadcast %cst_2 : f32 to vector<8x256xf32>
    %18 = arith.select %16, %1, %17 : vector<8x256xi1>, vector<8x256xf32>
    %c1_i32_3 = arith.constant 1 : i32
    %19 = vector.broadcast %c1_i32_3 : i32 to vector<1x256xi32>
    %20 = arith.cmpi sge, %6, %19 : vector<1x256xi32>
    %c14_i32_4 = arith.constant 14 : i32
    %21 = vector.broadcast %c14_i32_4 : i32 to vector<1x256xi32>
    %22 = arith.cmpi sle, %6, %21 : vector<1x256xi32>
    %cst_5 = arith.constant 0.000000e+00 : f32
    %23 = vector.broadcast %cst_5 : f32 to vector<8x256xf32>
    %c17_i32 = arith.constant 17 : i32
    %24 = tpu.dynamic_rotate %12 by %c17_i32 dim 1 : vector<8x256xf32>, i32 -> vector<8x256xf32>
    %cst_6 = arith.constant 0.000000e+00 : f32
    %25 = vector.shape_cast %20 : vector<1x256xi1> to vector<1x256xi1>
    %26 = vector.broadcast %25 : vector<1x256xi1> to vector<8x256xi1>
    %27 = vector.broadcast %cst_6 : f32 to vector<8x256xf32>
    %28 = arith.select %26, %24, %27 : vector<8x256xi1>, vector<8x256xf32>
    %c0_7 = arith.constant 0 : index
    %c0_8 = arith.constant 0 : index
    %29 = vector.load %arg2[%c0_7, %c0_8] : memref<8x14xf32, #tpu.memory_space<vmem>>, vector<8x1xf32>
    %30 = vector.broadcast %29 : vector<8x1xf32> to vector<8x256xf32>
    %31 = arith.mulf %28, %30 : vector<8x256xf32>
    %32 = arith.addf %23, %31 : vector<8x256xf32>
    %c16_i32 = arith.constant 16 : i32
    %33 = tpu.dynamic_rotate %1 by %c16_i32 dim 1 : vector<8x256xf32>, i32 -> vector<8x256xf32>
    %cst_9 = arith.constant 0.000000e+00 : f32
    %34 = vector.shape_cast %20 : vector<1x256xi1> to vector<1x256xi1>
    %35 = vector.broadcast %34 : vector<1x256xi1> to vector<8x256xi1>
    %36 = vector.broadcast %cst_9 : f32 to vector<8x256xf32>
    %37 = arith.select %35, %33, %36 : vector<8x256xi1>, vector<8x256xf32>
    %c0_10 = arith.constant 0 : index
    %c1 = arith.constant 1 : index
    %38 = vector.load %arg2[%c0_10, %c1] : memref<8x14xf32, #tpu.memory_space<vmem>>, vector<8x1xf32>
    %39 = vector.broadcast %38 : vector<8x1xf32> to vector<8x256xf32>
    %40 = arith.mulf %37, %39 : vector<8x256xf32>
    %41 = arith.addf %32, %40 : vector<8x256xf32>
    %c15_i32_11 = arith.constant 15 : i32
    %42 = tpu.dynamic_rotate %18 by %c15_i32_11 dim 1 : vector<8x256xf32>, i32 -> vector<8x256xf32>
    %cst_12 = arith.constant 0.000000e+00 : f32
    %43 = vector.shape_cast %20 : vector<1x256xi1> to vector<1x256xi1>
    %44 = vector.broadcast %43 : vector<1x256xi1> to vector<8x256xi1>
    %45 = vector.broadcast %cst_12 : f32 to vector<8x256xf32>
    %46 = arith.select %44, %42, %45 : vector<8x256xi1>, vector<8x256xf32>
    %c0_13 = arith.constant 0 : index
    %c2 = arith.constant 2 : index
    %47 = vector.load %arg2[%c0_13, %c2] : memref<8x14xf32, #tpu.memory_space<vmem>>, vector<8x1xf32>
    %48 = vector.broadcast %47 : vector<8x1xf32> to vector<8x256xf32>
    %49 = arith.mulf %46, %48 : vector<8x256xf32>
    %50 = arith.addf %41, %49 : vector<8x256xf32>
    %c1_i32_14 = arith.constant 1 : i32
    %51 = tpu.dynamic_rotate %12 by %c1_i32_14 dim 1 : vector<8x256xf32>, i32 -> vector<8x256xf32>
    %c0_15 = arith.constant 0 : index
    %c3 = arith.constant 3 : index
    %52 = vector.load %arg2[%c0_15, %c3] : memref<8x14xf32, #tpu.memory_space<vmem>>, vector<8x1xf32>
    %53 = vector.broadcast %52 : vector<8x1xf32> to vector<8x256xf32>
    %54 = arith.mulf %51, %53 : vector<8x256xf32>
    %55 = arith.addf %50, %54 : vector<8x256xf32>
    %c0_16 = arith.constant 0 : index
    %c4 = arith.constant 4 : index
    %56 = vector.load %arg2[%c0_16, %c4] : memref<8x14xf32, #tpu.memory_space<vmem>>, vector<8x1xf32>
    %57 = vector.broadcast %56 : vector<8x1xf32> to vector<8x256xf32>
    %58 = arith.mulf %1, %57 : vector<8x256xf32>
    %59 = arith.addf %55, %58 : vector<8x256xf32>
    %c255_i32 = arith.constant 255 : i32
    %60 = tpu.dynamic_rotate %18 by %c255_i32 dim 1 : vector<8x256xf32>, i32 -> vector<8x256xf32>
    %c0_17 = arith.constant 0 : index
    %c5 = arith.constant 5 : index
    %61 = vector.load %arg2[%c0_17, %c5] : memref<8x14xf32, #tpu.memory_space<vmem>>, vector<8x1xf32>
    %62 = vector.broadcast %61 : vector<8x1xf32> to vector<8x256xf32>
    %63 = arith.mulf %60, %62 : vector<8x256xf32>
    %64 = arith.addf %59, %63 : vector<8x256xf32>
    %c241_i32 = arith.constant 241 : i32
    %65 = tpu.dynamic_rotate %12 by %c241_i32 dim 1 : vector<8x256xf32>, i32 -> vector<8x256xf32>
    %cst_18 = arith.constant 0.000000e+00 : f32
    %66 = vector.shape_cast %22 : vector<1x256xi1> to vector<1x256xi1>
    %67 = vector.broadcast %66 : vector<1x256xi1> to vector<8x256xi1>
    %68 = vector.broadcast %cst_18 : f32 to vector<8x256xf32>
    %69 = arith.select %67, %65, %68 : vector<8x256xi1>, vector<8x256xf32>
    %c0_19 = arith.constant 0 : index
    %c6 = arith.constant 6 : index
    %70 = vector.load %arg2[%c0_19, %c6] : memref<8x14xf32, #tpu.memory_space<vmem>>, vector<8x1xf32>
    %71 = vector.broadcast %70 : vector<8x1xf32> to vector<8x256xf32>
    %72 = arith.mulf %69, %71 : vector<8x256xf32>
    %73 = arith.addf %64, %72 : vector<8x256xf32>
    %c240_i32 = arith.constant 240 : i32
    %74 = tpu.dynamic_rotate %1 by %c240_i32 dim 1 : vector<8x256xf32>, i32 -> vector<8x256xf32>
    %cst_20 = arith.constant 0.000000e+00 : f32
    %75 = vector.shape_cast %22 : vector<1x256xi1> to vector<1x256xi1>
    %76 = vector.broadcast %75 : vector<1x256xi1> to vector<8x256xi1>
    %77 = vector.broadcast %cst_20 : f32 to vector<8x256xf32>
    %78 = arith.select %76, %74, %77 : vector<8x256xi1>, vector<8x256xf32>
    %c0_21 = arith.constant 0 : index
    %c7 = arith.constant 7 : index
    %79 = vector.load %arg2[%c0_21, %c7] : memref<8x14xf32, #tpu.memory_space<vmem>>, vector<8x1xf32>
    %80 = vector.broadcast %79 : vector<8x1xf32> to vector<8x256xf32>
    %81 = arith.mulf %78, %80 : vector<8x256xf32>
    %82 = arith.addf %73, %81 : vector<8x256xf32>
    %c239_i32 = arith.constant 239 : i32
    %83 = tpu.dynamic_rotate %18 by %c239_i32 dim 1 : vector<8x256xf32>, i32 -> vector<8x256xf32>
    %cst_22 = arith.constant 0.000000e+00 : f32
    %84 = vector.shape_cast %22 : vector<1x256xi1> to vector<1x256xi1>
    %85 = vector.broadcast %84 : vector<1x256xi1> to vector<8x256xi1>
    %86 = vector.broadcast %cst_22 : f32 to vector<8x256xf32>
    %87 = arith.select %85, %83, %86 : vector<8x256xi1>, vector<8x256xf32>
    %c0_23 = arith.constant 0 : index
    %c8 = arith.constant 8 : index
    %88 = vector.load %arg2[%c0_23, %c8] : memref<8x14xf32, #tpu.memory_space<vmem>>, vector<8x1xf32>
    %89 = vector.broadcast %88 : vector<8x1xf32> to vector<8x256xf32>
    %90 = arith.mulf %87, %89 : vector<8x256xf32>
    %91 = arith.addf %82, %90 : vector<8x256xf32>
    %c0_24 = arith.constant 0 : index
    %c9 = arith.constant 9 : index
    %92 = vector.load %arg2[%c0_24, %c9] : memref<8x14xf32, #tpu.memory_space<vmem>>, vector<8x1xf32>
    %c0_25 = arith.constant 0 : index
    %c10 = arith.constant 10 : index
    %93 = vector.load %arg2[%c0_25, %c10] : memref<8x14xf32, #tpu.memory_space<vmem>>, vector<8x1xf32>
    %c0_26 = arith.constant 0 : index
    %c11 = arith.constant 11 : index
    %94 = vector.load %arg2[%c0_26, %c11] : memref<8x14xf32, #tpu.memory_space<vmem>>, vector<8x1xf32>
    %c0_27 = arith.constant 0 : index
    %c12 = arith.constant 12 : index
    %95 = vector.load %arg2[%c0_27, %c12] : memref<8x14xf32, #tpu.memory_space<vmem>>, vector<8x1xf32>
    %c0_28 = arith.constant 0 : index
    %c13 = arith.constant 13 : index
    %96 = vector.load %arg2[%c0_28, %c13] : memref<8x14xf32, #tpu.memory_space<vmem>>, vector<8x1xf32>
    %cst_29 = arith.constant 0.000000e+00 : f32
    %97 = vector.broadcast %cst_29 : f32 to vector<8x256xf32>
    %98 = vector.extract_strided_slice %91 {offsets = [0, 0], sizes = [1, 256], strides = [1, 1]} : vector<8x256xf32> to vector<1x256xf32>
    %99 = vector.broadcast %92 : vector<8x1xf32> to vector<8x256xf32>
    %100 = vector.broadcast %98 : vector<1x256xf32> to vector<8x256xf32>
    %101 = arith.mulf %99, %100 : vector<8x256xf32>
    %102 = arith.addf %97, %101 : vector<8x256xf32>
    %103 = vector.extract_strided_slice %91 {offsets = [1, 0], sizes = [1, 256], strides = [1, 1]} : vector<8x256xf32> to vector<1x256xf32>
    %104 = vector.broadcast %93 : vector<8x1xf32> to vector<8x256xf32>
    %105 = vector.broadcast %103 : vector<1x256xf32> to vector<8x256xf32>
    %106 = arith.mulf %104, %105 : vector<8x256xf32>
    %107 = arith.addf %102, %106 : vector<8x256xf32>
    %108 = vector.extract_strided_slice %91 {offsets = [2, 0], sizes = [1, 256], strides = [1, 1]} : vector<8x256xf32> to vector<1x256xf32>
    %109 = vector.broadcast %94 : vector<8x1xf32> to vector<8x256xf32>
    %110 = vector.broadcast %108 : vector<1x256xf32> to vector<8x256xf32>
    %111 = arith.mulf %109, %110 : vector<8x256xf32>
    %112 = arith.addf %107, %111 : vector<8x256xf32>
    %113 = vector.extract_strided_slice %91 {offsets = [3, 0], sizes = [1, 256], strides = [1, 1]} : vector<8x256xf32> to vector<1x256xf32>
    %114 = vector.broadcast %95 : vector<8x1xf32> to vector<8x256xf32>
    %115 = vector.broadcast %113 : vector<1x256xf32> to vector<8x256xf32>
    %116 = arith.mulf %114, %115 : vector<8x256xf32>
    %117 = arith.addf %112, %116 : vector<8x256xf32>
    %118 = vector.broadcast %96 : vector<8x1xf32> to vector<8x256xf32>
    %119 = arith.addf %117, %118 : vector<8x256xf32>
    %cst_30 = arith.constant 0.000000e+00 : f32
    %120 = vector.broadcast %cst_30 : f32 to vector<8x256xf32>
    %121 = vector.extract_strided_slice %91 {offsets = [4, 0], sizes = [1, 256], strides = [1, 1]} : vector<8x256xf32> to vector<1x256xf32>
    %122 = vector.broadcast %92 : vector<8x1xf32> to vector<8x256xf32>
    %123 = vector.broadcast %121 : vector<1x256xf32> to vector<8x256xf32>
    %124 = arith.mulf %122, %123 : vector<8x256xf32>
    %125 = arith.addf %120, %124 : vector<8x256xf32>
    %126 = vector.extract_strided_slice %91 {offsets = [5, 0], sizes = [1, 256], strides = [1, 1]} : vector<8x256xf32> to vector<1x256xf32>
    %127 = vector.broadcast %93 : vector<8x1xf32> to vector<8x256xf32>
    %128 = vector.broadcast %126 : vector<1x256xf32> to vector<8x256xf32>
    %129 = arith.mulf %127, %128 : vector<8x256xf32>
    %130 = arith.addf %125, %129 : vector<8x256xf32>
    %131 = vector.extract_strided_slice %91 {offsets = [6, 0], sizes = [1, 256], strides = [1, 1]} : vector<8x256xf32> to vector<1x256xf32>
    %132 = vector.broadcast %94 : vector<8x1xf32> to vector<8x256xf32>
    %133 = vector.broadcast %131 : vector<1x256xf32> to vector<8x256xf32>
    %134 = arith.mulf %132, %133 : vector<8x256xf32>
    %135 = arith.addf %130, %134 : vector<8x256xf32>
    %136 = vector.extract_strided_slice %91 {offsets = [7, 0], sizes = [1, 256], strides = [1, 1]} : vector<8x256xf32> to vector<1x256xf32>
    %137 = vector.broadcast %95 : vector<8x1xf32> to vector<8x256xf32>
    %138 = vector.broadcast %136 : vector<1x256xf32> to vector<8x256xf32>
    %139 = arith.mulf %137, %138 : vector<8x256xf32>
    %140 = arith.addf %135, %139 : vector<8x256xf32>
    %141 = vector.broadcast %96 : vector<8x1xf32> to vector<8x256xf32>
    %142 = arith.addf %140, %141 : vector<8x256xf32>
    %143 = tpu.concatenate %119, %142 in 0 : vector<8x256xf32>, vector<8x256xf32> -> vector<16x256xf32>
    %c0_31 = arith.constant 0 : index
    %c0_32 = arith.constant 0 : index
    %c0_33 = arith.constant 0 : index
    %144 = vector.load %arg3[%c0_31, %c0_32, %c0_33] : memref<1x16x256xf32, #tpu.memory_space<vmem>>, vector<1x16x256xf32>
    %145 = vector.shape_cast %144 : vector<1x16x256xf32> to vector<16x256xf32>
    %146 = vector.shape_cast %143 : vector<16x256xf32> to vector<1x16x256xf32>
    tpu.vector_store %arg3[%c0_31, %c0_32, %c0_33], %146 {strides = array<i32>} : memref<1x16x256xf32, #tpu.memory_space<vmem>>, vector<1x16x256xf32>,
    return
  }
  func.func @transform_0(%arg0: i32) -> (i32, i32, i32) {
    %c0_i32 = arith.constant 0 : i32
    %c0_i32_0 = arith.constant 0 : i32
    %c0_i32_1 = arith.constant 0 : i32
    return %arg0, %c0_i32, %c0_i32_0 : i32, i32, i32
  }
  func.func @transform_1(%arg0: i32) -> (i32, i32) {
    %c0_i32 = arith.constant 0 : i32
    %c0_i32_0 = arith.constant 0 : i32
    %c0_i32_1 = arith.constant 0 : i32
    return %c0_i32, %c0_i32_0 : i32, i32
  }
  func.func @transform_2(%arg0: i32) -> (i32, i32, i32) {
    %c0_i32 = arith.constant 0 : i32
    %c0_i32_0 = arith.constant 0 : i32
    %c0_i32_1 = arith.constant 0 : i32
    return %arg0, %c0_i32, %c0_i32_0 : i32, i32, i32
  }
}

</mosaic_0001>

<llo_original>
// kernel: tpu_custom_call.1
$region0: #{tpu_custom_call.1}
  #allocation0 [shape = 'u32[]', space=smem, size = 0x4, offset = 0x4, fixed_abs, tag = 'smem constant byte address 0x4 - core index']
  #allocation1 [shape = 'u32[144,128]{1,0:T(1,128)}', space=vmem, size = 0x12000, scoped, tag = 'internal scratch']
  %s0 = inlined_call_operand.hbm [shape: f32[1,8,256], index: 0, kind: input, shape index: {}]
  %s1 = inlined_call_operand.hbm [shape: f32[8,14], index: 1, kind: input, shape index: {}]
  %s2 = inlined_call_operand.hbm [shape: f32[1,16,256], index: 2, kind: output, shape index: {}]
  %s3 = sld [smem:[#allocation0]]
  $region26: #{tpu_custom_call.1} parent=0
    _
  %s5 = ssub.s32 1, %s3
  %s6 = scalar_select 0, %s5, %s3
  $region1: #{tpu_custom_call.1} parent=0
    #allocation2 [shape = 'u8[8192]{0}', space=vmem, size = 0x2000, scoped, tag = 'input window, operand 0, single buffered']
    #allocation3 [shape = 's32[1]{0}', space=sflag, size = 0x4, scoped, tag = 'scoped memory for tpu_custom_call.1']
    #allocation4 [shape = 's32[1]{0}', space=sflag, size = 0x4, scoped, tag = 'scoped memory for tpu_custom_call.1']
    #allocation5 [shape = 'u8[4096]{0}', space=vmem, size = 0x1000, scoped, tag = 'input window, operand 1, single buffered']
    #allocation6 [shape = 's32[1]{0}', space=sflag, size = 0x4, scoped, tag = 'scoped memory for tpu_custom_call.1']
    #allocation7 [shape = 'u8[16384]{0}', space=vmem, size = 0x4000, scoped, tag = 'output window, operand 0, single buffered']
    %7 = vsyncpa [#allocation3], 0
    %8 = vsyncpa [#allocation6], 0
    %9 = vsyncpa [#allocation4], 0
    // Predicated region
    $region2: #{tpu_custom_call.1} parent=1 // pred_check
      _
    $region3: #{tpu_custom_call.1} parent=1 // pred_check_branch
      %11 = sbr.rel (0) target = $region5
    $region4: #{tpu_custom_call.1} parent=1 // pred_region
      %s13 = ssub.s32 256, 256
      %14 = vsyncadd [#allocation3], %s13
      %s16 = sshll.u32 [#allocation2], 4
      %s17 = int_to_ptr.vmem [resolvable:$true] %s16
      %19 = dma.hbm_to_vmem [thread:$0]  %s0, 256, %s17, [#allocation3]
    $region5: #{tpu_custom_call.1} parent=1 // pred_fallthru
      _
    // Predicated region
    $region6: #{tpu_custom_call.1} parent=1 // pred_check
      _
    $region7: #{tpu_custom_call.1} parent=1 // pred_check_branch
      %21 = sbr.rel (0) target = $region9
    $region8: #{tpu_custom_call.1} parent=1 // pred_region
      %s23 = ssub.s32 128, 128
      %24 = vsyncadd [#allocation6], %s23
      %s26 = sshll.u32 [#allocation5], 4
      %s27 = int_to_ptr.vmem [resolvable:$true] %s26
      %29 = dma.hbm_to_vmem [thread:$0]  %s1, 128, %s27, [#allocation6]
    $region9: #{tpu_custom_call.1} parent=1 // pred_fallthru
      _
    // Predicated region
    $region10: #{tpu_custom_call.1} parent=1 // pred_check
      _
    $region11: #{tpu_custom_call.1} parent=1 // pred_check_branch
      %31 = sbr.rel (0) target = $region13
    $region12: #{tpu_custom_call.1} parent=1 // pred_region
      %32 = dma.done [#allocation3], 256
    $region13: #{tpu_custom_call.1} parent=1 // pred_fallthru
      _
    // Predicated region
    $region14: #{tpu_custom_call.1} parent=1 // pred_check
      _
    $region15: #{tpu_custom_call.1} parent=1 // pred_check_branch
      %34 = sbr.rel (0) target = $region17
    $region16: #{tpu_custom_call.1} parent=1 // pred_region
      %35 = dma.done [#allocation6], 128
    $region17: #{tpu_custom_call.1} parent=1 // pred_fallthru
      _
    %v36 = vld [vmem:[#allocation2] sm:$0xff]
    %v37 = vld [vmem:[#allocation2 + $0x8] sm:$0xff]
    %v38 = vlaneseq
    %v39 = vand.u32 %v38, 127
    %v40 = vadd.s32 %v39, 128
    %v41 = vand.u32 %v39, 15
    %v42 = vand.u32 %v40, 15
    %v43 = vshra.s32 %v39, 4
    %v44 = vshra.s32 %v40, 4
    %vm45 = vcmp.le.s32.totalorder %v41, 14
    %vm46 = vcmp.le.s32.totalorder %v42, 14
    %v47 = vsel %vm45, 1, 0
    %v48 = vsel %vm46, 1, 0
    %vm49 = vcmp.eq.s32.totalorder %v47, 1
    %vm50 = vcmp.eq.s32.totalorder %v48, 1
    %v51 = vsel %vm49, %v36, 0.0
    %v52 = vsel %vm50, %v37, 0.0
    %vm53 = vcmp.ge.s32.totalorder %v41, 1
    %vm54 = vcmp.ge.s32.totalorder %v42, 1
    %v55 = vsel %vm53, 1, 0
    %v56 = vsel %vm54, 1, 0
    %vm57 = vcmp.eq.s32.totalorder %v55, 1
    %vm58 = vcmp.eq.s32.totalorder %v56, 1
    %v59 = vsel %vm57, %v36, 0.0
    %v60 = vsel %vm58, %v37, 0.0
    %vm61 = vcmp.ge.s32.totalorder %v43, 1
    %vm62 = vcmp.ge.s32.totalorder %v44, 1
    %vm63 = vcmp.le.s32.totalorder %v43, 14
    %vm64 = vcmp.le.s32.totalorder %v44, 14
    %65 = vrot.lane.b32.xlu0 %v51, 17
    %v66 = vpop.permute.xlu0 %65
    %67 = vrot.lane.b32.xlu0 %v52, 17
    %v68 = vpop.permute.xlu0 %67
    %vm69 = vcmp.lt.s32.totalorder %v39, 17
    %v70 = vsel %vm69, %v66, %v68
    %v71 = vsel %vm69, %v68, %v66
    %v72 = vsel %vm61, 1, 0
    %v73 = vsel %vm62, 1, 0
    %vm74 = vcmp.eq.s32.totalorder %v72, 1
    %vm75 = vcmp.eq.s32.totalorder %v73, 1
    %v76 = vsel %vm74, %v71, 0.0
    %v77 = vsel %vm75, %v70, 0.0
    %v78 = vld [vmem:[#allocation5] sm:$0xff]
    %80 = vset.pattern.permute.xlu0 0
    %81 = vperm.xlu0 %80, %v78
    %v82 = vpop.permute.xlu0 %81
    %v84 = vmul.f32 %v76, %v82
    %v85 = vmul.f32 %v77, %v82
    %v86 = vadd.f32 %v84, 0.0
    %v87 = vadd.f32 %v85, 0.0
    %88 = vrot.lane.b32.xlu0 %v36, 16
    %v89 = vpop.permute.xlu0 %88
    %90 = vrot.lane.b32.xlu0 %v37, 16
    %v91 = vpop.permute.xlu0 %90
    %vm92 = vcmp.lt.s32.totalorder %v39, 16
    %v93 = vsel %vm92, %v89, %v91
    %v94 = vsel %vm92, %v91, %v89
    %v95 = vsel %vm74, %v94, 0.0
    %v96 = vsel %vm75, %v93, 0.0
    %97 = vset.pattern.permute.xlu0 1
    %98 = vperm.xlu0 %97, %v78
    %v99 = vpop.permute.xlu0 %98
    %v101 = vmul.f32 %v95, %v99
    %v102 = vmul.f32 %v96, %v99
    %v103 = vadd.f32 %v86, %v101
    %v104 = vadd.f32 %v87, %v102
    %105 = vrot.lane.b32.xlu0 %v59, 15
    %v106 = vpop.permute.xlu0 %105
    %107 = vrot.lane.b32.xlu0 %v60, 15
    %v108 = vpop.permute.xlu0 %107
    %vm109 = vcmp.lt.s32.totalorder %v39, 15
    %v110 = vsel %vm109, %v106, %v108
    %v111 = vsel %vm109, %v108, %v106
    %v112 = vsel %vm74, %v111, 0.0
    %v113 = vsel %vm75, %v110, 0.0
    %114 = vset.pattern.permute.xlu0 2
    %115 = vperm.xlu0 %114, %v78
    %v116 = vpop.permute.xlu0 %115
    %v118 = vmul.f32 %v112, %v116
    %v119 = vmul.f32 %v113, %v116
    %v120 = vadd.f32 %v103, %v118
    %v121 = vadd.f32 %v104, %v119
    %122 = vrot.lane.b32.xlu0 %v51, 1
    %v123 = vpop.permute.xlu0 %122
    %124 = vrot.lane.b32.xlu0 %v52, 1
    %v125 = vpop.permute.xlu0 %124
    %vm126 = vcmp.lt.s32.totalorder %v39, 1
    %v127 = vsel %vm126, %v123, %v125
    %v128 = vsel %vm126, %v125, %v123
    %129 = vset.pattern.permute.xlu0 3
    %130 = vperm.xlu0 %129, %v78
    %v131 = vpop.permute.xlu0 %130
    %v133 = vmul.f32 %v128, %v131
    %v134 = vmul.f32 %v127, %v131
    %v135 = vadd.f32 %v120, %v133
    %v136 = vadd.f32 %v121, %v134
    %137 = vset.pattern.permute.xlu0 4
    %138 = vperm.xlu0 %137, %v78
    %v139 = vpop.permute.xlu0 %138
    %v141 = vmul.f32 %v36, %v139
    %v142 = vmul.f32 %v37, %v139
    %v143 = vadd.f32 %v135, %v141
    %v144 = vadd.f32 %v136, %v142
    %145 = vrot.lane.b32.xlu0 %v59, 127
    %v146 = vpop.permute.xlu0 %145
    %147 = vrot.lane.b32.xlu0 %v60, 127
    %v148 = vpop.permute.xlu0 %147
    %vm149 = vcmp.lt.s32.totalorder %v39, 127
    %v150 = vsel %vm149, %v146, %v148
    %v151 = vsel %vm149, %v148, %v146
    %152 = vset.pattern.permute.xlu0 5
    %153 = vperm.xlu0 %152, %v78
    %v154 = vpop.permute.xlu0 %153
    %v156 = vmul.f32 %v150, %v154
    %v157 = vmul.f32 %v151, %v154
    %v158 = vadd.f32 %v143, %v156
    %v159 = vadd.f32 %v144, %v157
    %160 = vrot.lane.b32.xlu0 %v51, 113
    %v161 = vpop.permute.xlu0 %160
    %162 = vrot.lane.b32.xlu0 %v52, 113
    %v163 = vpop.permute.xlu0 %162
    %vm164 = vcmp.lt.s32.totalorder %v39, 113
    %v165 = vsel %vm164, %v161, %v163
    %v166 = vsel %vm164, %v163, %v161
    %v167 = vsel %vm63, 1, 0
    %v168 = vsel %vm64, 1, 0
    %vm169 = vcmp.eq.s32.totalorder %v167, 1
    %vm170 = vcmp.eq.s32.totalorder %v168, 1
    %v171 = vsel %vm169, %v165, 0.0
    %v172 = vsel %vm170, %v166, 0.0
    %173 = vset.pattern.permute.xlu0 6
    %174 = vperm.xlu0 %173, %v78
    %v175 = vpop.permute.xlu0 %174
    %v177 = vmul.f32 %v171, %v175
    %v178 = vmul.f32 %v172, %v175
    %v179 = vadd.f32 %v158, %v177
    %v180 = vadd.f32 %v159, %v178
    %181 = vrot.lane.b32.xlu0 %v36, 112
    %v182 = vpop.permute.xlu0 %181
    %183 = vrot.lane.b32.xlu0 %v37, 112
    %v184 = vpop.permute.xlu0 %183
    %vm185 = vcmp.lt.s32.totalorder %v39, 112
    %v186 = vsel %vm185, %v182, %v184
    %v187 = vsel %vm185, %v184, %v182
    %v188 = vsel %vm169, %v186, 0.0
    %v189 = vsel %vm170, %v187, 0.0
    %190 = vset.pattern.permute.xlu0 7
    %191 = vperm.xlu0 %190, %v78
    %v192 = vpop.permute.xlu0 %191
    %v194 = vmul.f32 %v188, %v192
    %v195 = vmul.f32 %v189, %v192
    %v196 = vadd.f32 %v179, %v194
    %v197 = vadd.f32 %v180, %v195
    %198 = vrot.lane.b32.xlu0 %v59, 111
    %v199 = vpop.permute.xlu0 %198
    %200 = vrot.lane.b32.xlu0 %v60, 111
    %v201 = vpop.permute.xlu0 %200
    %vm202 = vcmp.lt.s32.totalorder %v39, 111
    %v203 = vsel %vm202, %v199, %v201
    %v204 = vsel %vm202, %v201, %v199
    %v205 = vsel %vm169, %v203, 0.0
    %v206 = vsel %vm170, %v204, 0.0
    %207 = vset.pattern.permute.xlu0 8
    %208 = vperm.xlu0 %207, %v78
    %v209 = vpop.permute.xlu0 %208
    %v211 = vmul.f32 %v205, %v209
    %v212 = vmul.f32 %v206, %v209
    %v213 = vadd.f32 %v196, %v211
    %v214 = vadd.f32 %v197, %v212
    %215 = vset.pattern.permute.xlu0 9
    %216 = vperm.xlu0 %215, %v78
    %v217 = vpop.permute.xlu0 %216
    %v219 = vlaneseq
    %v220 = vshrl.u32 %v219, 7
    %v221 = vsub.s32 0, %v220
    %v222 = vrot.slane %v213, %v221
    %v223 = vlaneseq
    %v224 = vshrl.u32 %v223, 7
    %v225 = vsub.s32 0, %v224
    %v226 = vrot.slane %v214, %v225
    %v227 = vmul.f32 %v217, %v222
    %v228 = vmul.f32 %v217, %v226
    %v229 = vadd.f32 %v227, 0.0
    %v230 = vadd.f32 %v228, 0.0
    %231 = vset.pattern.permute.xlu0 10
    %232 = vperm.xlu0 %231, %v78
    %v233 = vpop.permute.xlu0 %232
    %v235 = vlaneseq
    %v236 = vshrl.u32 %v235, 7
    %v237 = vsub.s32 1, %v236
    %v238 = vrot.slane %v213, %v237
    %v239 = vlaneseq
    %v240 = vshrl.u32 %v239, 7
    %v241 = vsub.s32 1, %v240
    %v242 = vrot.slane %v214, %v241
    %v243 = vmul.f32 %v233, %v238
    %v244 = vmul.f32 %v233, %v242
    %v245 = vadd.f32 %v229, %v243
    %v246 = vadd.f32 %v230, %v244
    %247 = vset.pattern.permute.xlu0 11
    %248 = vperm.xlu0 %247, %v78
    %v249 = vpop.permute.xlu0 %248
    %v251 = vlaneseq
    %v252 = vshrl.u32 %v251, 7
    %v253 = vsub.s32 2, %v252
    %v254 = vrot.slane %v213, %v253
    %v255 = vlaneseq
    %v256 = vshrl.u32 %v255, 7
    %v257 = vsub.s32 2, %v256
    %v258 = vrot.slane %v214, %v257
    %v259 = vmul.f32 %v249, %v254
    %v260 = vmul.f32 %v249, %v258
    %v261 = vadd.f32 %v245, %v259
    %v262 = vadd.f32 %v246, %v260
    %263 = vset.pattern.permute.xlu0 12
    %264 = vperm.xlu0 %263, %v78
    %v265 = vpop.permute.xlu0 %264
    %v267 = vlaneseq
    %v268 = vshrl.u32 %v267, 7
    %v269 = vsub.s32 3, %v268
    %v270 = vrot.slane %v213, %v269
    %v271 = vlaneseq
    %v272 = vshrl.u32 %v271, 7
    %v273 = vsub.s32 3, %v272
    %v274 = vrot.slane %v214, %v273
    %v275 = vmul.f32 %v265, %v270
    %v276 = vmul.f32 %v265, %v274
    %v277 = vadd.f32 %v261, %v275
    %v278 = vadd.f32 %v262, %v276
    %279 = vset.pattern.permute.xlu0 13
    %280 = vperm.xlu0 %279, %v78
    %v281 = vpop.permute.xlu0 %280
    %v283 = vadd.f32 %v277, %v281
    %v284 = vadd.f32 %v278, %v281
    %v285 = vlaneseq
    %v286 = vshrl.u32 %v285, 7
    %v287 = vsub.s32 4, %v286
    %v288 = vrot.slane %v213, %v287
    %v289 = vlaneseq
    %v290 = vshrl.u32 %v289, 7
    %v291 = vsub.s32 4, %v290
    %v292 = vrot.slane %v214, %v291
    %v293 = vmul.f32 %v217, %v288
    %v294 = vmul.f32 %v217, %v292
    %v295 = vadd.f32 %v293, 0.0
    %v296 = vadd.f32 %v294, 0.0
    %v297 = vlaneseq
    %v298 = vshrl.u32 %v297, 7
    %v299 = vsub.s32 5, %v298
    %v300 = vrot.slane %v213, %v299
    %v301 = vlaneseq
    %v302 = vshrl.u32 %v301, 7
    %v303 = vsub.s32 5, %v302
    %v304 = vrot.slane %v214, %v303
    %v305 = vmul.f32 %v233, %v300
    %v306 = vmul.f32 %v233, %v304
    %v307 = vadd.f32 %v295, %v305
    %v308 = vadd.f32 %v296, %v306
    %v309 = vlaneseq
    %v310 = vshrl.u32 %v309, 7
    %v311 = vsub.s32 6, %v310
    %v312 = vrot.slane %v213, %v311
    %v313 = vlaneseq
    %v314 = vshrl.u32 %v313, 7
    %v315 = vsub.s32 6, %v314
    %v316 = vrot.slane %v214, %v315
    %v317 = vmul.f32 %v249, %v312
    %v318 = vmul.f32 %v249, %v316
    %v319 = vadd.f32 %v307, %v317
    %v320 = vadd.f32 %v308, %v318
    %v321 = vlaneseq
    %v322 = vshrl.u32 %v321, 7
    %v323 = vsub.s32 7, %v322
    %v324 = vrot.slane %v213, %v323
    %v325 = vlaneseq
    %v326 = vshrl.u32 %v325, 7
    %v327 = vsub.s32 7, %v326
    %v328 = vrot.slane %v214, %v327
    %v329 = vmul.f32 %v265, %v324
    %v330 = vmul.f32 %v265, %v328
    %v331 = vadd.f32 %v319, %v329
    %v332 = vadd.f32 %v320, %v330
    %v333 = vadd.f32 %v331, %v281
    %v334 = vadd.f32 %v332, %v281
    %335 = vst [vmem:[#allocation7] sm:$0xff] %v283
    %336 = vst [vmem:[#allocation7 + $0x8] sm:$0xff] %v284
    %337 = vst [vmem:[#allocation7 + $0x10] sm:$0xff] %v333
    %338 = vst [vmem:[#allocation7 + $0x18] sm:$0xff] %v334
    // Predicated region
    $region18: #{tpu_custom_call.1} parent=1 // pred_check
      _
    $region19: #{tpu_custom_call.1} parent=1 // pred_check_branch
      %340 = sbr.rel (0) target = $region21
    $region20: #{tpu_custom_call.1} parent=1 // pred_region
      %s342 = ssub.s32 512, 512
      %343 = vsyncadd [#allocation4], %s342
      %s344 = sshll.u32 [#allocation7], 4
      %s345 = int_to_ptr.vmem [resolvable:$true] %s344
      %350 = dma.vmem_to_hbm [thread:$0]  %s345, 512, %s2, [#allocation4], 256, 256, 16
    $region21: #{tpu_custom_call.1} parent=1 // pred_fallthru
      _
    // Predicated region
    $region22: #{tpu_custom_call.1} parent=1 // pred_check
      _
    $region23: #{tpu_custom_call.1} parent=1 // pred_check_branch
      %352 = sbr.rel (0) target = $region25
    $region24: #{tpu_custom_call.1} parent=1 // pred_region
      %353 = dma.done [#allocation4], 512
    $region25: #{tpu_custom_call.1} parent=1 // pred_fallthru
      _
    %354 = vsyncpa [#allocation3], 1
    %355 = vsyncpa [#allocation6], 1
    %356 = vsyncpa [#allocation4], 1

</llo_original>
